<compile_context>
chip_gen: v7x
topology: tpu7x:2x2x1
jax: 0.10.0
libtpu: 0.0.40
codegen_flags: <defaults>
</compile_context>

<pallas_src>
import functools

import numpy as np
import jax
import jax.numpy as jnp
from jax import lax
from jax.experimental import pallas as pl
from jax.experimental.pallas import tpu as pltpu


def _rup(x, m):
    return ((x + m - 1) // m) * m


# ----------------------------------------------------------------------------
# Pallas kernels: tiled matmul with fused bias + activation.
# ----------------------------------------------------------------------------
def _apply_act(r, act):
    if act == "relu":
        return jnp.maximum(r, 0.0)
    if act == "sigmoid":
        # numerically stable sigmoid (tanh is EUP-supported and bounded)
        return 0.5 * (jnp.tanh(0.5 * r) + 1.0)
    return r


def _mm_kernel_single(a_ref, b_ref, bias_ref, o_ref, *, act):
    # single reduction step: no accumulator scratch needed
    r = jnp.dot(a_ref[...], b_ref[...], preferred_element_type=jnp.float32)
    r = r + bias_ref[...]
    o_ref[...] = _apply_act(r, act).astype(o_ref.dtype)


def _mm_kernel_multi(a_ref, b_ref, bias_ref, o_ref, acc_ref, *, act):
    k = pl.program_id(2)

    @pl.when(k == 0)
    def _():
        acc_ref[...] = jnp.zeros_like(acc_ref)

    acc_ref[...] += jnp.dot(a_ref[...], b_ref[...],
                            preferred_element_type=jnp.float32)

    @pl.when(k == pl.num_programs(2) - 1)
    def _():
        r = acc_ref[...] + bias_ref[...]
        o_ref[...] = _apply_act(r, act).astype(o_ref.dtype)


def matmul_bias_act(a, b, bias, act="none", *, bias_axis=1,
                    tm=None, tn=None, tk=None):
    """act(a @ b + bias) with f32 accumulation; returns float32 (M, N).

    a: (M, K), b: (K, N) (f32 or bf16).  bias broadcasts over rows
    (bias_axis=1, shape (N,)) or over columns (bias_axis=0, shape (M,)).
    """
    m, k = a.shape
    k2, n = b.shape
    assert k == k2
    if tm is None:
        tm = min(512, _rup(m, 16))
    if tn is None:
        tn = 512 if n >= 4096 else (256 if n >= 256 else _rup(n, 128))
    if tk is None:
        tk = k if k <= 2048 else 2048        # big-K layers: 2048-wide chunks
    mp, np_, kp = _rup(m, tm), _rup(n, tn), _rup(k, tk)
    nk = kp // tk

    a_p = a if (mp == m and kp == k) else jnp.pad(a, ((0, mp - m), (0, kp - k)))
    b_p = b if (kp == k and np_ == n) else jnp.pad(b, ((0, kp - k), (0, np_ - n)))
    bias = bias.astype(jnp.float32)
    if bias_axis == 1:
        bias_p = jnp.pad(bias.reshape(1, n), ((0, 0), (0, np_ - n)))
        bias_spec = pl.BlockSpec((1, tn), lambda i, j, kk: (0, j))
    else:
        bias_p = jnp.pad(bias.reshape(m, 1), ((0, mp - m), (0, 0)))
        bias_spec = pl.BlockSpec((tm, 1), lambda i, j, kk: (i, 0))

    if nk == 1:
        kernel = functools.partial(_mm_kernel_single, act=act)
        scratch = []
    else:
        kernel = functools.partial(_mm_kernel_multi, act=act)
        scratch = [pltpu.VMEM((tm, tn), jnp.float32)]

    out = pl.pallas_call(
        kernel,
        out_shape=jax.ShapeDtypeStruct((mp, np_), jnp.float32),
        grid_spec=pltpu.PrefetchScalarGridSpec(
            num_scalar_prefetch=0,
            grid=(mp // tm, np_ // tn, nk),
            in_specs=[
                pl.BlockSpec((tm, tk), lambda i, j, kk: (i, kk)),
                pl.BlockSpec((tk, tn), lambda i, j, kk: (kk, j)),
                bias_spec,
            ],
            out_specs=pl.BlockSpec((tm, tn), lambda i, j, kk: (i, j)),
            scratch_shapes=scratch,
        ),
        compiler_params=pltpu.CompilerParams(
            dimension_semantics=("parallel", "parallel", "arbitrary")),
    )(a_p, b_p, bias_p)
    if mp == m and np_ == n:
        return out
    return out[:m, :n]


# ----------------------------------------------------------------------------
# Sub-pixel (stride^2) decomposition of ConvTranspose2d(stride=2).
# ----------------------------------------------------------------------------
def _tap_table(K, padding):
    """Shared 3-tap window + per-parity kernel-tap indices (or -1 if absent)."""
    ds, Js = {}, {}
    for t in (0, 1):
        r = (t + padding) % 2
        ds[t] = (t + padding) // 2
        Js[t] = (K - r + 1) // 2
    w0 = min(ds[t] - (Js[t] - 1) for t in (0, 1))
    win = max(ds[t] for t in (0, 1)) - w0 + 1          # == 3 for K in {5, 6}
    ky = {}
    for t in (0, 1):
        r = (t + padding) % 2
        ky[t] = []
        for a in range(win):
            kk = 2 * (ds[t] - w0 - a) + r
            ky[t].append(kk if 0 <= kk < K else -1)
    return w0, win, ky


def _subpixel_weight_matrix(w, padding):
    """PyTorch (Cin, Cout, K, K) weight -> (win*win*Cin, 4*Cout) matmul weight.

    Row order: (tap_a, tap_b, ci); column order: (ty, tx, co).
    """
    cin, cout, K, _ = w.shape
    _, win, ky = _tap_table(K, padding)
    zeros = jnp.zeros((cin, cout), w.dtype)
    blocks = []
    for ty in (0, 1):
        for tx in (0, 1):
            taps = []
            for a in range(win):
                for b in range(win):
                    kya, kxb = ky[ty][a], ky[tx][b]
                    taps.append(zeros if (kya < 0 or kxb < 0)
                                else w[:, :, kya, kxb])
            blocks.append(jnp.stack(taps, 0).reshape(win * win * cin, cout))
    return jnp.concatenate(blocks, axis=1)


def _padded_input(x, K, padding, mh, mw):
    """Pad NHWC input so 3-tap windows cover every sub-pixel base position."""
    n, h, w_in, cin = x.shape
    w0, win, _ = _tap_table(K, padding)
    lo = -w0
    hi_h = mh + win - 1 - lo - h
    hi_w = mw + win - 1 - lo - w_in
    return jnp.pad(x, ((0, 0), (lo, hi_h), (lo, hi_w), (0, 0))), win


def conv_t2d_subpixel(x, wm, bias4, *, K, padding, output_padding, cout, act):
    """ConvTranspose2d(stride=2) on NHWC input -> NHWC output (f32)."""
    n, h, w_in, cin = x.shape
    h_out = (h - 1) * 2 - 2 * padding + K + output_padding
    w_out = (w_in - 1) * 2 - 2 * padding + K + output_padding
    mh, mw = (h_out + 1) // 2, (w_out + 1) // 2
    xp, win = _padded_input(x.astype(jnp.bfloat16), K, padding, mh, mw)

    cols = [xp[:, a:a + mh, b:b + mw, :]
            for a in range(win) for b in range(win)]
    patches = jnp.concatenate(cols, axis=-1).reshape(n * mh * mw,
                                                     win * win * cin)
    y = matmul_bias_act(patches, wm, bias4, act=act)          # (n*mh*mw, 4*cout)
    y = y.reshape(n, mh, mw, 2, 2, cout)
    y = jnp.transpose(y, (0, 1, 3, 2, 4, 5)).reshape(n, 2 * mh, 2 * mw, cout)
    return y[:, :h_out, :w_out, :]


def conv_t2d_subpixel_cmajor(x, wm_t, bias4, *, K, padding, output_padding,
                             cout, act):
    """Same op, but lane-dense channel-major matmul; returns NCHW (f32).

    Used for the thin final layer (Cout=3): output tile is (16, spatial) so the
    big spatial axis is on the lane dimension instead of padding 12->128 lanes.
    """
    n, h, w_in, cin = x.shape
    h_out = (h - 1) * 2 - 2 * padding + K + output_padding
    w_out = (w_in - 1) * 2 - 2 * padding + K + output_padding
    mh, mw = (h_out + 1) // 2, (w_out + 1) // 2
    xp, win = _padded_input(x.astype(jnp.bfloat16), K, padding, mh, mw)

    xpt = jnp.transpose(xp, (3, 0, 1, 2))                     # (cin, n, mh+2, mw+2)
    cols = [xpt[:, :, a:a + mh, b:b + mw]
            for a in range(win) for b in range(win)]
    patches_t = jnp.stack(cols, axis=0).reshape(win * win * cin, n * mh * mw)

    yt = matmul_bias_act(wm_t, patches_t, bias4, act=act, bias_axis=0)
    yt = yt[:4 * cout]                                        # (4*cout, n*mh*mw)
    y = yt.reshape(2, 2, cout, n, mh, mw)
    y = jnp.transpose(y, (3, 2, 4, 0, 5, 1)).reshape(n, cout, 2 * mh, 2 * mw)
    return y[:, :, :h_out, :w_out]


# ----------------------------------------------------------------------------
# Bilinear 2x upsampling (align_corners=True), via the same fused matmul.
# ----------------------------------------------------------------------------
def _bilinear_matrix(size_in, size_out):
    u = np.zeros((size_out, size_in), np.float32)
    if size_in == 1:
        u[:, 0] = 1.0
        return jnp.asarray(u)
    src = np.arange(size_out, dtype=np.float64) * (size_in - 1) / (size_out - 1)
    i0 = np.clip(np.floor(src).astype(np.int64), 0, size_in - 2)
    frac = (src - i0).astype(np.float32)
    u[np.arange(size_out), i0] += 1.0 - frac
    u[np.arange(size_out), i0 + 1] += frac
    return jnp.asarray(u)


def upsample_bilinear_2x(x):
    n, h, w, c = x.shape
    ho, wo = 2 * h, 2 * w
    uh = _bilinear_matrix(h, ho)
    uw = _bilinear_matrix(w, wo)
    zeros_w = jnp.zeros((wo,), jnp.float32)
    zeros_h = jnp.zeros((ho,), jnp.float32)

    a = jnp.transpose(x, (0, 1, 3, 2)).reshape(n * h * c, w)
    t = matmul_bias_act(a, uw.T, zeros_w).reshape(n, h, c, wo)
    a2 = jnp.transpose(t, (0, 2, 3, 1)).reshape(n * c * wo, h)
    o = matmul_bias_act(a2, uh.T, zeros_h).reshape(n, c, wo, ho)
    return jnp.transpose(o, (0, 3, 2, 1))


# ----------------------------------------------------------------------------
# Decoder forward (mirrors the PyTorch Sequential exactly).
# ----------------------------------------------------------------------------
def prepare_params(params):
    """PyTorch-layout params -> matmul-ready (bf16) sub-pixel weight matrices."""
    pp = {}
    convs = [("1", 5, 1), ("2", 5, 0), ("3", 5, 0), ("4", 6, 0)]
    for name, K, pad in convs:
        w, b = params[f"w{name}"], params[f"b{name}"]
        wm = _subpixel_weight_matrix(w, pad)        # (9*cin, 4*cout) f32
        b4 = jnp.tile(b, 4).astype(jnp.float32)
        if name == "4":
            pp["wm4t"] = wm.T.astype(jnp.bfloat16)  # (12, 288) channel-major
            pp["bc4"] = b4
        else:
            pp[f"wm{name}"] = wm.astype(jnp.bfloat16)
            pp[f"bt{name}"] = b4
    return pp


def decoder_forward(pp, z):
    n = z.shape[0]
    # z.view(-1, 2048, 1, 1) then UpsamplingBilinear2d(2) on a 1x1 map:
    # align_corners bilinear from 1x1 is exact replication -> broadcast.
    x = jnp.broadcast_to(z.reshape(n, 1, 1, 2048), (n, 2, 2, 2048))
    x = conv_t2d_subpixel(x, pp["wm1"], pp["bt1"], K=5, padding=1,
                          output_padding=1, cout=128, act="relu")   # (N,6,6,128)
    x = conv_t2d_subpixel(x, pp["wm2"], pp["bt2"], K=5, padding=0,
                          output_padding=0, cout=64, act="relu")    # (N,15,15,64)
    x = upsample_bilinear_2x(x)                                     # (N,30,30,64)
    x = conv_t2d_subpixel(x, pp["wm3"], pp["bt3"], K=5, padding=0,
                          output_padding=0, cout=32, act="relu")    # (N,63,63,32)
    x = upsample_bilinear_2x(x)                                     # (N,126,126,32)
    y = conv_t2d_subpixel_cmajor(x, pp["wm4t"], pp["bc4"], K=6, padding=0,
                                 output_padding=0, cout=3,
                                 act="sigmoid")                     # (N,3,256,256)
    return y


def init_params(key):
    # Deterministic synthetic init; shapes match torch.nn.ConvTranspose2d.
    specs = [(2048, 128, 5), (128, 64, 5), (64, 32, 5), (32, 3, 6)]
    params = {}
    for idx, (cin, cout, k) in enumerate(specs, start=1):
        key, kw, kb = jax.random.split(key, 3)
        bound = 1.0 / np.sqrt(cin * k * k)
        params[f"w{idx}"] = jax.random.uniform(kw, (cin, cout, k, k),
                                               jnp.float32, -bound, bound)
        params[f"b{idx}"] = jax.random.uniform(kb, (cout,),
                                               jnp.float32, -bound, bound)
    return params

# TODO(synk): `reparametrization` uses torch.cuda RNG and is not part of
# forward(); it is intentionally not ported.


# ----------------------------------------------------------------------------
# Pure-JAX reference (for correctness checks only).
# ----------------------------------------------------------------------------
def _ref_conv_transpose(x_nhwc, w, b, padding, output_padding):
    K = w.shape[2]
    kern = jnp.transpose(w[:, :, ::-1, ::-1], (2, 3, 0, 1))   # (K,K,Cin,Cout)
    lo = K - 1 - padding
    hi = K - 1 - padding + output_padding
    y = lax.conv_general_dilated(
        x_nhwc, kern, window_strides=(1, 1),
        padding=((lo, hi), (lo, hi)), lhs_dilation=(2, 2),
        dimension_numbers=("NHWC", "HWIO", "NHWC"),
        precision=lax.Precision.HIGHEST)
    return y + b.reshape(1, 1, 1, -1)


def _ref_upsample(x):
    n, h, w, c = x.shape
    uh = _bilinear_matrix(h, 2 * h)
    uw = _bilinear_matrix(w, 2 * w)
    t = jnp.einsum("nhwc,vw->nhvc", x, uw, precision=lax.Precision.HIGHEST)
    return jnp.einsum("nhwc,uh->nuwc", t, uh, precision=lax.Precision.HIGHEST)


def decoder_reference(params, z):
    n = z.shape[0]
    x = z.reshape(n, 1, 1, 2048)
    x = _ref_upsample(x)
    x = jax.nn.relu(_ref_conv_transpose(x, params["w1"], params["b1"], 1, 1))
    x = jax.nn.relu(_ref_conv_transpose(x, params["w2"], params["b2"], 0, 0))
    x = _ref_upsample(x)
    x = jax.nn.relu(_ref_conv_transpose(x, params["w3"], params["b3"], 0, 0))
    x = _ref_upsample(x)
    x = jax.nn.sigmoid(_ref_conv_transpose(x, params["w4"], params["b4"], 0, 0))
    return jnp.transpose(x, (0, 3, 1, 2))


if __name__ == "__main__":
    root = jax.random.PRNGKey(0)
    pkey, zkey = jax.random.split(root)
    params = init_params(pkey)
    z = jax.random.normal(zkey, (2, 2048), jnp.float32)

    # --- unit test: fused matmul kernel, bf16 operands, f32 accumulation ----
    a = jax.random.normal(jax.random.PRNGKey(1), (37, 200), jnp.float32)
    b = jax.random.normal(jax.random.PRNGKey(2), (200, 19), jnp.float32)
    bias = jax.random.normal(jax.random.PRNGKey(3), (19,), jnp.float32)
    a16, b16 = a.astype(jnp.bfloat16), b.astype(jnp.bfloat16)
    got16 = jax.block_until_ready(matmul_bias_act(a16, b16, bias, act="relu"))
    want16 = np.maximum(np.asarray(a16, np.float64) @ np.asarray(b16, np.float64)
                        + np.asarray(bias, np.float64), 0.0)
    np.testing.assert_allclose(np.asarray(got16), want16, rtol=1e-3, atol=1e-3)

    got32 = jax.block_until_ready(matmul_bias_act(a, b, bias, act="relu"))
    want32 = np.maximum(np.asarray(a, np.float64) @ np.asarray(b, np.float64)
                        + np.asarray(bias, np.float64), 0.0)
    np.testing.assert_allclose(np.asarray(got32), want32, rtol=2e-2, atol=2e-2)

    # --- unit test: sub-pixel ConvTranspose2d vs lax reference (all configs) -
    for cfg_i, (K, pad, opad, hin) in enumerate([(5, 1, 1, 4), (5, 0, 0, 6),
                                                 (6, 0, 0, 9)]):
        tkey = jax.random.PRNGKey(10 + cfg_i)
        k1, k2, k3 = jax.random.split(tkey, 3)
        cin, cout = 16, 8
        wt = jax.random.normal(k1, (cin, cout, K, K), jnp.float32) / np.sqrt(
            cin * K * K)
        bt = jax.random.normal(k2, (cout,), jnp.float32) * 0.1
        xt = jax.random.normal(k3, (2, hin, hin, cin), jnp.float32)
        wm = _subpixel_weight_matrix(wt, pad).astype(jnp.bfloat16)
        b4 = jnp.tile(bt, 4)
        got = conv_t2d_subpixel(xt, wm, b4, K=K, padding=pad,
                                output_padding=opad, cout=cout, act="none")
        ref = _ref_conv_transpose(xt, wt, bt, pad, opad)
        np.testing.assert_allclose(np.asarray(got), np.asarray(ref),
                                   rtol=2e-2, atol=2e-2)
        got_c = conv_t2d_subpixel_cmajor(xt, wm.T, b4, K=K, padding=pad,
                                         output_padding=opad, cout=cout,
                                         act="none")
        np.testing.assert_allclose(np.asarray(got_c),
                                   np.asarray(jnp.transpose(ref, (0, 3, 1, 2))),
                                   rtol=2e-2, atol=2e-2)

    # --- full forward ------------------------------------------------------
    pp = jax.jit(prepare_params)(params)
    fwd = jax.jit(decoder_forward)
    y = jax.block_until_ready(fwd(pp, z))

    assert y.shape == (2, 3, 256, 256), y.shape
    assert y.dtype == jnp.float32
    assert bool(jnp.all(jnp.isfinite(y)))
    assert bool(jnp.all((y >= 0.0) & (y <= 1.0)))   # sigmoid output range

    # end-to-end check against a pure-JAX reference of the torch module
    y_ref = jax.block_until_ready(jax.jit(decoder_reference)(params, z))
    np.testing.assert_allclose(np.asarray(y), np.asarray(y_ref),
                               rtol=0.0, atol=3e-2)

    print("KERNEL_OK")
</pallas_src>

<mosaic_0001>
module attributes {stable_mosaic.version = 11 : i64} {
  func.func @_mm_kernel_single(%arg0: i32, %arg1: i32, %arg2: i32, %arg3: memref<48x200xbf16, #tpu.memory_space<vmem>>, %arg4: memref<200x128xbf16, #tpu.memory_space<vmem>>, %arg5: memref<1x128xf32, #tpu.memory_space<vmem>>, %arg6: memref<48x128xf32, #tpu.memory_space<vmem>>) attributes {dimension_semantics = [#tpu.dimension_semantics<parallel>, #tpu.dimension_semantics<parallel>, #tpu.dimension_semantics<arbitrary>], iteration_bounds = array<i64: 1, 1, 1>, scalar_prefetch = 0 : i64, scratch_operands = 0 : i64, tpu.core_type = #tpu.core_type<tc>, window_params = [{transform_indices = @transform_0, window_bounds = array<i64: 48, 200>}, {transform_indices = @transform_1, window_bounds = array<i64: 200, 128>}, {transform_indices = @transform_2, window_bounds = array<i64: 1, 128>}, {transform_indices = @transform_3, window_bounds = array<i64: 48, 128>}]} {
    %c0 = arith.constant 0 : index
    %c0_0 = arith.constant 0 : index
    %0 = vector.load %arg3[%c0, %c0_0] : memref<48x200xbf16, #tpu.memory_space<vmem>>, vector<48x200xbf16>
    %c0_1 = arith.constant 0 : index
    %c0_2 = arith.constant 0 : index
    %1 = vector.load %arg4[%c0_1, %c0_2] : memref<200x128xbf16, #tpu.memory_space<vmem>>, vector<200x128xbf16>
    %cst = arith.constant dense<0.000000e+00> : vector<48x128xf32>
    %2 = tpu.matmul %0, %1, %cst {dimension_numbers = #tpu.dot_dimension_numbers<[1], [0], [0], [1], [0, 0, 1, 1], [], []>} : vector<48x200xbf16>, vector<200x128xbf16>, vector<48x128xf32> -> vector<48x128xf32>
    %c0_3 = arith.constant 0 : index
    %c0_4 = arith.constant 0 : index
    %3 = vector.load %arg5[%c0_3, %c0_4] : memref<1x128xf32, #tpu.memory_space<vmem>>, vector<1x128xf32>
    %4 = vector.broadcast %3 : vector<1x128xf32> to vector<48x128xf32>
    %5 = arith.addf %2, %4 : vector<48x128xf32>
    %cst_5 = arith.constant 0.000000e+00 : f32
    %6 = vector.broadcast %cst_5 : f32 to vector<48x128xf32>
    %7 = arith.maximumf %5, %6 : vector<48x128xf32>
    %c0_6 = arith.constant 0 : index
    %c0_7 = arith.constant 0 : index
    %8 = vector.load %arg6[%c0_6, %c0_7] : memref<48x128xf32, #tpu.memory_space<vmem>>, vector<48x128xf32>
    tpu.vector_store %arg6[%c0_6, %c0_7], %7 {strides = array<i32>} : memref<48x128xf32, #tpu.memory_space<vmem>>, vector<48x128xf32>,
    return
  }
  func.func @transform_0(%arg0: i32, %arg1: i32, %arg2: i32) -> (i32, i32) {
    %c0_i32 = arith.constant 0 : i32
    return %arg0, %arg2 : i32, i32
  }
  func.func @transform_1(%arg0: i32, %arg1: i32, %arg2: i32) -> (i32, i32) {
    %c0_i32 = arith.constant 0 : i32
    return %arg2, %arg1 : i32, i32
  }
  func.func @transform_2(%arg0: i32, %arg1: i32, %arg2: i32) -> (i32, i32) {
    %c0_i32 = arith.constant 0 : i32
    %c0_i32_0 = arith.constant 0 : i32
    return %c0_i32, %arg1 : i32, i32
  }
  func.func @transform_3(%arg0: i32, %arg1: i32, %arg2: i32) -> (i32, i32) {
    %c0_i32 = arith.constant 0 : i32
    return %arg0, %arg1 : i32, i32
  }
}

</mosaic_0001>

<llo_original>
// kernel: tpu_custom_call.1
$region0: #{tpu_custom_call.1}
  #allocation0 [shape = 'u32[]', space=smem, size = 0x4, offset = 0x4, fixed_abs, tag = 'smem constant byte address 0x4 - core index']
  #allocation1 [shape = 'u32[144,128]{1,0:T(1,128)}', space=vmem, size = 0x12000, scoped, tag = 'internal scratch']
  %s0 = inlined_call_operand.hbm [shape: bf16[48,200], index: 0, kind: input, shape index: {}]
  %s1 = inlined_call_operand.hbm [shape: bf16[200,128], index: 1, kind: input, shape index: {}]
  %s2 = inlined_call_operand.vmem [shape: f32[1,128], index: 2, kind: input, shape index: {}]
  %s3 = inlined_call_operand.hbm [shape: f32[48,128], index: 3, kind: output, shape index: {}]
  %s4 = sld [smem:[#allocation0]]
  $region30: #{tpu_custom_call.1} parent=0
    _
  %s6 = ssub.s32 1, %s4
  %s7 = scalar_select 0, %s6, %s4
  $region1: #{tpu_custom_call.1} parent=0
    #allocation2 [shape = 'u8[24576]{0}', space=vmem, size = 0x6000, scoped, tag = 'input window, operand 0, single buffered']
    #allocation3 [shape = 's32[1]{0}', space=sflag, size = 0x4, scoped, tag = 'scoped memory for tpu_custom_call.1']
    #allocation4 [shape = 's32[1]{0}', space=sflag, size = 0x4, scoped, tag = 'scoped memory for tpu_custom_call.1']
    #allocation5 [shape = 'u8[51200]{0}', space=vmem, size = 0xc800, scoped, tag = 'input window, operand 1, single buffered']
    #allocation6 [shape = 's32[1]{0}', space=sflag, size = 0x4, scoped, tag = 'scoped memory for tpu_custom_call.1']
    #allocation7 [shape = 'u8[24576]{0}', space=vmem, size = 0x6000, scoped, tag = 'output window, operand 0, single buffered']
    %8 = vsyncpa [#allocation3], 0
    %9 = vsyncpa [#allocation6], 0
    %10 = vsyncpa [#allocation4], 0
    // Predicated region
    $region2: #{tpu_custom_call.1} parent=1 // pred_check
      _
    $region3: #{tpu_custom_call.1} parent=1 // pred_check_branch
      %12 = sbr.rel (0) target = $region5
    $region4: #{tpu_custom_call.1} parent=1 // pred_region
      %s14 = ssub.s32 768, 768
      %15 = vsyncadd [#allocation3], %s14
      %s16 = sshll.u32 [#allocation2], 4
      %s17 = int_to_ptr.vmem [resolvable:$true] %s16
      %22 = dma.hbm_to_vmem [thread:$0]  %s0, 768, %s17, [#allocation3], 128, 128, 8
    $region5: #{tpu_custom_call.1} parent=1 // pred_fallthru
      _
    // Predicated region
    $region6: #{tpu_custom_call.1} parent=1 // pred_check
      _
    $region7: #{tpu_custom_call.1} parent=1 // pred_check_branch
      %24 = sbr.rel (0) target = $region9
    $region8: #{tpu_custom_call.1} parent=1 // pred_region
      %s26 = ssub.s32 1600, 1600
      %27 = vsyncadd [#allocation6], %s26
      %s28 = sshll.u32 [#allocation5], 4
      %s29 = int_to_ptr.vmem [resolvable:$true] %s28
      %34 = dma.hbm_to_vmem [thread:$0]  %s1, 1600, %s29, [#allocation6], 64, 64, 4
    $region9: #{tpu_custom_call.1} parent=1 // pred_fallthru
      _
    // Predicated region
    $region10: #{tpu_custom_call.1} parent=1 // pred_check
      _
    $region11: #{tpu_custom_call.1} parent=1 // pred_check_branch
      %36 = sbr.rel (0) target = $region13
    $region12: #{tpu_custom_call.1} parent=1 // pred_region
      _
    $region13: #{tpu_custom_call.1} parent=1 // pred_fallthru
      _
    // Predicated region
    $region14: #{tpu_custom_call.1} parent=1 // pred_check
      _
    $region15: #{tpu_custom_call.1} parent=1 // pred_check_branch
      %38 = sbr.rel (0) target = $region17
    $region16: #{tpu_custom_call.1} parent=1 // pred_region
      %39 = dma.done [#allocation3], 768
    $region17: #{tpu_custom_call.1} parent=1 // pred_fallthru
      _
    // Predicated region
    $region18: #{tpu_custom_call.1} parent=1 // pred_check
      _
    $region19: #{tpu_custom_call.1} parent=1 // pred_check_branch
      %41 = sbr.rel (0) target = $region21
    $region20: #{tpu_custom_call.1} parent=1 // pred_region
      %42 = dma.done [#allocation6], 1600
    $region21: #{tpu_custom_call.1} parent=1 // pred_fallthru
      _
    %v44 = vld [vmem:[#allocation2] sm:$0xff]
    %v45 = vld [vmem:[#allocation2 + $0x8] sm:$0xff]
    %v46 = vld [vmem:[#allocation2 + $0x10] sm:$0xff]
    %v47 = vld [vmem:[#allocation2 + $0x18] sm:$0xff]
    %v48 = vld [vmem:[#allocation2 + $0x20] sm:$0xff]
    %v49 = vld [vmem:[#allocation2 + $0x28] sm:$0xff]
    %v50 = vld [vmem:[#allocation5] sm:$0xf]
    %v51 = vld [vmem:[#allocation5 + $0x4] sm:$0xf]
    %v52 = vld [vmem:[#allocation5 + $0x8] sm:$0xf]
    %v53 = vld [vmem:[#allocation5 + $0xc] sm:$0xf]
    %v54 = vld [vmem:[#allocation5 + $0x10] sm:$0xf]
    %v55 = vld [vmem:[#allocation5 + $0x14] sm:$0xf]
    %v56 = vld [vmem:[#allocation5 + $0x18] sm:$0xf]
    %v57 = vld [vmem:[#allocation5 + $0x1c] sm:$0xf]
    %v58 = vld [vmem:[#allocation5 + $0x20] sm:$0xf]
    %v59 = vld [vmem:[#allocation5 + $0x24] sm:$0xf]
    %v60 = vld [vmem:[#allocation5 + $0x28] sm:$0xf]
    %v61 = vld [vmem:[#allocation5 + $0x2c] sm:$0xf]
    %v62 = vld [vmem:[#allocation5 + $0x30] sm:$0xf]
    %v63 = vld [vmem:[#allocation5 + $0x34] sm:$0xf]
    %v64 = vld [vmem:[#allocation5 + $0x38] sm:$0xf]
    %v65 = vld [vmem:[#allocation5 + $0x3c] sm:$0xf]
    %v66 = vld [vmem:[#allocation5 + $0x40] sm:$0xf]
    %v67 = vld [vmem:[#allocation5 + $0x44] sm:$0xf]
    %v68 = vld [vmem:[#allocation5 + $0x48] sm:$0xf]
    %v69 = vld [vmem:[#allocation5 + $0x4c] sm:$0xf]
    %v70 = vld [vmem:[#allocation5 + $0x50] sm:$0xf]
    %v71 = vld [vmem:[#allocation5 + $0x54] sm:$0xf]
    %v72 = vld [vmem:[#allocation5 + $0x58] sm:$0xf]
    %v73 = vld [vmem:[#allocation5 + $0x5c] sm:$0xf]
    %v74 = vld [vmem:[#allocation5 + $0x60] sm:$0xf]
    %v75 = vld [vmem:[%s2] sm:$0x1]
    %v77 = vlaneseq
    %v78 = vshrl.u32 %v77, 7
    %v79 = vsub.s32 0, %v78
    %v80 = vrot.slane %v75, %v79
    %v88 = vunpack.c.l.b16 %v44
    %v89 = vunpack.c.h.b16 %v44
    %v90 = vunpack.c.l.b16 %v45
    %v91 = vunpack.c.h.b16 %v45
    %v92 = vunpack.c.l.b16 %v46
    %v93 = vunpack.c.h.b16 %v46
    %v94 = vunpack.c.l.b16 %v47
    %v95 = vunpack.c.h.b16 %v47
    %v96 = vunpack.c.l.b16 %v48
    %v97 = vunpack.c.h.b16 %v48
    %v98 = vunpack.c.l.b16 %v49
    %v99 = vunpack.c.h.b16 %v49
    %v100 = vpack.c.b16 %v90, %v88
    %v101 = vpack.c.b16 %v91, %v89
    %v102 = vpack.c.b16 %v94, %v92
    %v103 = vpack.c.b16 %v95, %v93
    %v104 = vpack.c.b16 %v98, %v96
    %v105 = vpack.c.b16 %v99, %v97
    %v134 = vunpack.c.l.b16 %v50
    %v135 = vunpack.c.l.b16 %v51
    %v136 = vunpack.c.l.b16 %v52
    %v137 = vunpack.c.l.b16 %v53
    %v138 = vunpack.c.l.b16 %v54
    %v139 = vunpack.c.l.b16 %v55
    %v140 = vunpack.c.l.b16 %v56
    %v141 = vunpack.c.l.b16 %v57
    %v142 = vunpack.c.l.b16 %v58
    %v143 = vunpack.c.l.b16 %v59
    %v144 = vunpack.c.l.b16 %v60
    %v145 = vunpack.c.l.b16 %v61
    %v146 = vunpack.c.l.b16 %v62
    %v147 = vunpack.c.l.b16 %v63
    %v148 = vunpack.c.l.b16 %v64
    %v149 = vunpack.c.l.b16 %v65
    %v150 = vunpack.c.l.b16 %v66
    %v151 = vunpack.c.l.b16 %v67
    %v152 = vunpack.c.l.b16 %v68
    %v153 = vunpack.c.l.b16 %v69
    %v154 = vunpack.c.l.b16 %v70
    %v155 = vunpack.c.l.b16 %v71
    %v156 = vunpack.c.l.b16 %v72
    %v157 = vunpack.c.l.b16 %v73
    %v158 = vunpack.c.l.b16 %v74
    %v159 = vpack.c.b16 %v135, %v134
    %v160 = vpack.c.b16 %v137, %v136
    %v161 = vpack.c.b16 %v139, %v138
    %v162 = vpack.c.b16 %v141, %v140
    %v163 = vpack.c.b16 %v143, %v142
    %v164 = vpack.c.b16 %v145, %v144
    %v165 = vpack.c.b16 %v147, %v146
    %v166 = vpack.c.b16 %v149, %v148
    %v167 = vpack.c.b16 %v151, %v150
    %v168 = vpack.c.b16 %v153, %v152
    %v169 = vpack.c.b16 %v155, %v154
    %v170 = vpack.c.b16 %v157, %v156
    %v171 = vpack.c.b16 %v158, %v158
    %vm184 = vcmask 588800
    %v186 = vsel %vm184, %v101, 0
    %v189 = vsel %vm184, %v103, 0
    %v192 = vsel %vm184, %v105, 0
    %vm194 = vcmask 1043456
    %v196 = vsel %vm194, %v171, 0
    %198 = vmatprep.subr.bf16.mxu0 0
    %199 = vmatpush1.bf16.msra.mxu0 %v159
    %200 = vmatprep.subr.bf16.mxu0 0
    %201 = vmatpush1.bf16.msra.mxu0 %v160
    %202 = vmatprep.subr.bf16.mxu0 0
    %203 = vmatpush1.bf16.msra.mxu0 %v161
    %204 = vmatprep.subr.bf16.mxu0 0
    %205 = vmatpush1.bf16.msra.mxu0 %v162
    %206 = vmatprep.subr.bf16.mxu0 0
    %207 = vmatpush1.bf16.msra.mxu0 %v163
    %208 = vmatprep.subr.bf16.mxu0 0
    %209 = vmatpush1.bf16.msra.mxu0 %v164
    %210 = vmatprep.subr.bf16.mxu0 0
    %211 = vmatpush1.bf16.msra.mxu0 %v165
    %212 = vmatprep.subr.bf16.mxu0 0
    %213 = vmatpush1.bf16.msra.mxu0 %v166
    %214 = vmatprep.subr.bf16.mxu0 0
    %215 = vmatpush1.bf16.msra.mxu0 %v167
    %216 = vmatprep.subr.bf16.mxu0 0
    %217 = vmatpush1.bf16.msra.mxu0 %v168
    %218 = vmatprep.subr.bf16.mxu0 0
    %219 = vmatpush1.bf16.msra.mxu0 %v169
    %220 = vmatprep.subr.bf16.mxu0 0
    %221 = vmatpush1.bf16.msra.mxu0 %v170
    %222 = vmatprep.subr.bf16.mxu0 0
    %223 = vmatpush1.bf16.msra.mxu0 %v196
    %224 = vmatprep.subr.bf16.mxu0 0
    %225 = vmatpush1.bf16.msra.mxu0 0
    %226 = vmatprep.subr.bf16.mxu0 0
    %227 = vmatpush1.bf16.msra.mxu0 0
    %228 = vmatprep.subr.bf16.mxu0 0
    %229 = vmatpush1.bf16.msra.mxu0 0
    %230 = vmatprep.mubr.bf16.mxu0 %v186
    %231 = vmatmul.mubr.bf16.gmra.mrb[0].mxu0 %v100
    %v232 = vpop.f32.mrb[0].mxu0
    %v233 = vadd.f32 %v80, %v232
    %v234 = vpop.f32.mrb[0].mxu0
    %v235 = vpop.f32.mrb[0].mxu0
    %v236 = vadd.f32 %v80, %v235
    %v237 = vpop.f32.mrb[0].mxu0
    %238 = vmatprep.mubr.bf16.mxu0 %v189
    %239 = vmatmul.mubr.bf16.gmra.mrb[0].mxu0 %v102
    %v240 = vpop.f32.mrb[0].mxu0
    %v241 = vadd.f32 %v80, %v240
    %v242 = vpop.f32.mrb[0].mxu0
    %v243 = vpop.f32.mrb[0].mxu0
    %v244 = vadd.f32 %v80, %v243
    %v245 = vpop.f32.mrb[0].mxu0
    %246 = vmatprep.mubr.bf16.mxu0 %v192
    %247 = vmatmul.mubr.bf16.gmra.mrb[0].mxu0 %v104
    %v248 = vpop.f32.mrb[0].mxu0
    %v249 = vadd.f32 %v80, %v248
    %v250 = vpop.f32.mrb[0].mxu0
    %v251 = vpop.f32.mrb[0].mxu0
    %v252 = vadd.f32 %v80, %v251
    %v253 = vpop.f32.mrb[0].mxu0
    %254 = vdwg.mxu0
    %v255 = vmax.f32 %v233, 0.0
    %v256 = vmax.f32 %v236, 0.0
    %v257 = vmax.f32 %v241, 0.0
    %v258 = vmax.f32 %v244, 0.0
    %v259 = vmax.f32 %v249, 0.0
    %v260 = vmax.f32 %v252, 0.0
    %261 = vst [vmem:[#allocation7] sm:$0xff] %v255
    %262 = vst [vmem:[#allocation7 + $0x8] sm:$0xff] %v256
    %263 = vst [vmem:[#allocation7 + $0x10] sm:$0xff] %v257
    %264 = vst [vmem:[#allocation7 + $0x18] sm:$0xff] %v258
    %265 = vst [vmem:[#allocation7 + $0x20] sm:$0xff] %v259
    %266 = vst [vmem:[#allocation7 + $0x28] sm:$0xff] %v260
    // Predicated region
    $region22: #{tpu_custom_call.1} parent=1 // pred_check
      _
    $region23: #{tpu_custom_call.1} parent=1 // pred_check_branch
      %268 = sbr.rel (0) target = $region25
    $region24: #{tpu_custom_call.1} parent=1 // pred_region
      %s270 = ssub.s32 768, 768
      %271 = vsyncadd [#allocation4], %s270
      %s272 = sshll.u32 [#allocation7], 4
      %s273 = int_to_ptr.vmem [resolvable:$true] %s272
      %278 = dma.vmem_to_hbm [thread:$0]  %s273, 768, %s3, [#allocation4], 128, 128, 8
    $region25: #{tpu_custom_call.1} parent=1 // pred_fallthru
      _
    // Predicated region
    $region26: #{tpu_custom_call.1} parent=1 // pred_check
      _
    $region27: #{tpu_custom_call.1} parent=1 // pred_check_branch
      %280 = sbr.rel (0) target = $region29
    $region28: #{tpu_custom_call.1} parent=1 // pred_region
      %281 = dma.done [#allocation4], 768
    $region29: #{tpu_custom_call.1} parent=1 // pred_fallthru
      _
    %282 = vsyncpa [#allocation3], 1
    %283 = vsyncpa [#allocation6], 1
    %284 = vsyncpa [#allocation4], 1

</llo_original>
